<compile_context>
chip_gen: v7x
topology: tpu7x:2x2x1
jax: 0.10.0
libtpu: 0.0.40
codegen_flags: <defaults>
</compile_context>

<pallas_src>
import functools

import jax
import jax.numpy as jnp
from jax.experimental import pallas as pl
from jax.experimental.pallas import tpu as pltpu

K = 5      # Conv1d kernel_size
PAD = 1    # Conv1d padding


def _round_up(v, m):
    return pl.cdiv(v, m) * m


def _toeplitz_conv_weight_slabs(conv_w, t_in, t_out, group):
    """Block-Toeplitz conv weight with columns grouped into `group`-time slabs.

    conv_w: (C_out, C_in, K) -- PyTorch Conv1d layout.
    Column (s*group + p)*C_out + o holds the weights mapping the flattened word
    activations (T*C_in,) to conv output time t = min(s*group + p, t_out-1) and
    output channel o.  Times past t_out-1 duplicate the last valid time
    (max(a, a) == a, so duplicates never affect the max-over-time).  The conv's
    boundary zero padding is absorbed into zero entries, so the activations
    never need an HBM-side pad.
    """
    c_out, c_in, k = conv_w.shape
    n_slabs = -(-t_out // group)
    t_cols = n_slabs * group
    t_col = jnp.minimum(jnp.arange(t_cols), t_out - 1)               # (t_cols,)
    s_idx = jnp.arange(t_in)[:, None, None]                          # (T,1,1)
    t_idx = t_col[None, :, None]                                     # (1,t_cols,1)
    k_idx = jnp.arange(k)[None, None, :]                             # (1,1,K)
    mask = (s_idx == t_idx + k_idx - PAD).astype(jnp.float32)        # (T,t_cols,K)
    w_kco = jnp.transpose(conv_w, (2, 1, 0)).astype(jnp.float32)     # (K,C_in,C_out)
    w_full = jnp.einsum("stk,kco->scto", mask, w_kco)                # (T,C_in,t_cols,C_out)
    return w_full.reshape(t_in * c_in, t_cols * c_out)


def _cnn_kernel(x_ref, w_ref, b_ref, o_ref, *, n_slabs, slab_w, c_out):
    """Fused conv-as-slab-matmuls + max-over-time + bias + ReLU for one tile.

    x_ref: (nb, T*C_in)            f32 lane-dense flattened words
    w_ref: (T*C_in, n_slabs*slab_w) bf16 slab-ordered block-Toeplitz weight
    b_ref: (1, C_out)              f32 bias
    o_ref: (nb, C_out)             f32 word embeddings for this tile
    """
    # In-kernel bf16 cast (MXU-native rate) -- keeps HBM traffic to a single
    # f32 read of x instead of a separate wrapper-side astype pass.
    x = x_ref[...].astype(jnp.bfloat16)

    # One MXU matmul per 128-lane slab of conv-output columns, fused with a
    # dense running max across slabs (no lane-sparse 13-step chain).
    r = None
    for s in range(n_slabs):
        y = jnp.dot(x, w_ref[:, s * slab_w:(s + 1) * slab_w],
                    preferred_element_type=jnp.float32)      # (nb, slab_w)
        r = y if r is None else jnp.maximum(r, y)

    # Collapse the `group` time positions packed along lanes with log2(group)
    # XLU rotates + dense maxima; afterwards lanes 0:c_out hold the full max.
    shift = slab_w // 2
    while shift >= c_out:
        r = jnp.maximum(r, pltpu.roll(r, shift=shift, axis=1))
        shift //= 2
    m = r[:, :c_out]

    # Bias + ReLU hoisted out of the time reduction (exact: ReLU monotone,
    # bias time-invariant):  max_t relu(a_t + b) == relu(max_t a_t + b).
    o_ref[...] = jnp.maximum(m + b_ref[...], 0.0).astype(o_ref.dtype)


def cnn_forward(x, conv_w, conv_b, *, n_block=4096):
    """x: (L, B, T, C_in) f32.  conv_w: (C_out, C_in, K); conv_b: (C_out,)
    (PyTorch Conv1d layout).  Returns (L, B, C_out) f32."""
    L, B, T, C = x.shape
    C_out = conv_w.shape[0]
    t_out = T + 2 * PAD - K + 1
    assert t_out >= 1, "max_word_len too small for kernel_size=5, padding=1"
    N = L * B

    # Slab configuration: pack `group` conv-time positions per 128 lanes when
    # C_out divides 128; otherwise fall back to one time per slab.
    group = 128 // C_out if (C_out <= 128 and 128 % C_out == 0) else 1
    n_slabs = -(-t_out // group)
    slab_w = group * C_out

    # Tile size: big to amortize the ~0.35us/grid-step overhead, a multiple of
    # 16 sublanes, shrunk only so the grid keeps >= 4 steps (>= 2 per core on
    # v7x megacore) when the problem is large enough.
    nb = max(16, min(n_block, _round_up(pl.cdiv(N, 4), 16)))
    grid = (pl.cdiv(N, nb),)      # ragged tail handled by Pallas OOB masking

    x2d = x.reshape(N, T * C)     # free contiguous view; stays f32
    w_big = _toeplitz_conv_weight_slabs(conv_w, T, t_out, group).astype(jnp.bfloat16)
    b_2d = conv_b.reshape(1, C_out).astype(jnp.float32)

    kernel = functools.partial(_cnn_kernel, n_slabs=n_slabs, slab_w=slab_w,
                               c_out=C_out)
    out = pl.pallas_call(
        kernel,
        out_shape=jax.ShapeDtypeStruct((N, C_out), jnp.float32),
        grid=grid,
        in_specs=[
            pl.BlockSpec((nb, T * C), lambda i: (i, 0)),                  # word tile (f32)
            pl.BlockSpec((T * C, n_slabs * slab_w), lambda i: (0, 0)),    # Toeplitz weight, resident
            pl.BlockSpec((1, C_out), lambda i: (0, 0)),                   # bias
        ],
        out_specs=pl.BlockSpec((nb, C_out), lambda i: (i, 0)),
        compiler_params=pltpu.CompilerParams(
            dimension_semantics=("parallel",),
            vmem_limit_bytes=48 * 1024 * 1024,
        ),
    )(x2d, w_big, b_2d)

    return out.reshape(L, B, C_out)


def cnn_reference(x, conv_w, conv_b, precision=jax.lax.Precision.HIGHEST):
    """Pure-JAX reference mirroring the PyTorch forward."""
    L, B, T, C = x.shape
    N = L * B
    x_ncl = jnp.transpose(x.reshape(N, T, C), (0, 2, 1))          # (N, C_in, T)
    y = jax.lax.conv_general_dilated(
        x_ncl, conv_w, window_strides=(1,), padding=[(PAD, PAD)],
        dimension_numbers=("NCH", "OIH", "NCH"), precision=precision)
    y = jnp.maximum(y + conv_b[None, :, None], 0.0)
    y = jnp.max(y, axis=2)
    return y.reshape(L, B, -1)


if __name__ == "__main__":
    # Small deterministic problem: max_seq_len=8, batch=2, max_word_len=16,
    # char_embed_size=16, word_embed_size=32.
    max_seq_len, batch, max_word_len = 8, 2, 16
    char_embed_size, word_embed_size = 16, 32

    key = jax.random.PRNGKey(0)
    kx, kw, kb = jax.random.split(key, 3)

    x = jax.random.normal(kx, (max_seq_len, batch, max_word_len, char_embed_size),
                          dtype=jnp.float32)

    fan_in = char_embed_size * K
    conv_w = jax.random.normal(kw, (word_embed_size, char_embed_size, K),
                               dtype=jnp.float32) * (1.0 / jnp.sqrt(fan_in))
    conv_b = jax.random.uniform(kb, (word_embed_size,), dtype=jnp.float32,
                                minval=-0.1, maxval=0.1)

    cnn_forward_j = jax.jit(cnn_forward)
    out = jax.block_until_ready(cnn_forward_j(x, conv_w, conv_b))
    assert out.shape == (max_seq_len, batch, word_embed_size), out.shape

    # Quantization-matched reference (same bf16 rounding of x / conv weight as
    # the kernel, f32 accumulation) -> tight tolerance.
    ref_q = jax.block_until_ready(
        cnn_reference(x.astype(jnp.bfloat16).astype(jnp.float32),
                      conv_w.astype(jnp.bfloat16).astype(jnp.float32), conv_b))
    assert jnp.allclose(out, ref_q, atol=1e-3, rtol=1e-3), \
        float(jnp.max(jnp.abs(out - ref_q)))

    # Full-precision reference -> loose (bf16-level) tolerance sanity check.
    ref = jax.block_until_ready(cnn_reference(x, conv_w, conv_b))
    assert jnp.allclose(out, ref, atol=5e-2, rtol=5e-2), \
        float(jnp.max(jnp.abs(out - ref)))

    print("KERNEL_OK")
</pallas_src>

<mosaic_0001>
module attributes {stable_mosaic.version = 11 : i64} {
  func.func @_cnn_kernel(%arg0: i32, %arg1: memref<16x256xf32, #tpu.memory_space<vmem>>, %arg2: memref<256x512xbf16, #tpu.memory_space<vmem>>, %arg3: memref<1x32xf32, #tpu.memory_space<vmem>>, %arg4: memref<16x32xf32, #tpu.memory_space<vmem>>) attributes {dimension_semantics = [#tpu.dimension_semantics<parallel>], iteration_bounds = array<i64: 1>, scalar_prefetch = 0 : i64, scratch_operands = 0 : i64, tpu.core_type = #tpu.core_type<tc>, window_params = [{transform_indices = @transform_0, window_bounds = array<i64: 16, 256>}, {pipeline_mode = #tpu.pipeline_mode<synchronous>, transform_indices = @transform_1, window_bounds = array<i64: 256, 512>}, {pipeline_mode = #tpu.pipeline_mode<synchronous>, transform_indices = @transform_2, window_bounds = array<i64: 1, 32>}, {transform_indices = @transform_3, window_bounds = array<i64: 16, 32>}]} {
    %c0 = arith.constant 0 : index
    %c0_0 = arith.constant 0 : index
    %0 = vector.load %arg1[%c0, %c0_0] : memref<16x256xf32, #tpu.memory_space<vmem>>, vector<16x256xf32>
    %1 = arith.truncf %0 : vector<16x256xf32> to vector<16x256xbf16>
    %c0_1 = arith.constant 0 : index
    %c0_2 = arith.constant 0 : index
    %2 = vector.load %arg2[%c0_1, %c0_2] : memref<256x512xbf16, #tpu.memory_space<vmem>>, vector<256x128xbf16>
    %cst = arith.constant dense<0.000000e+00> : vector<16x128xf32>
    %3 = tpu.matmul %1, %2, %cst {dimension_numbers = #tpu.dot_dimension_numbers<[1], [0], [0], [1], [0, 0, 1, 1], [], []>} : vector<16x256xbf16>, vector<256x128xbf16>, vector<16x128xf32> -> vector<16x128xf32>
    %c0_3 = arith.constant 0 : index
    %c128 = arith.constant 128 : index
    %4 = vector.load %arg2[%c0_3, %c128] : memref<256x512xbf16, #tpu.memory_space<vmem>>, vector<256x128xbf16>
    %cst_4 = arith.constant dense<0.000000e+00> : vector<16x128xf32>
    %5 = tpu.matmul %1, %4, %cst_4 {dimension_numbers = #tpu.dot_dimension_numbers<[1], [0], [0], [1], [0, 0, 1, 1], [], []>} : vector<16x256xbf16>, vector<256x128xbf16>, vector<16x128xf32> -> vector<16x128xf32>
    %6 = arith.maximumf %3, %5 : vector<16x128xf32>
    %c0_5 = arith.constant 0 : index
    %c256 = arith.constant 256 : index
    %7 = vector.load %arg2[%c0_5, %c256] : memref<256x512xbf16, #tpu.memory_space<vmem>>, vector<256x128xbf16>
    %cst_6 = arith.constant dense<0.000000e+00> : vector<16x128xf32>
    %8 = tpu.matmul %1, %7, %cst_6 {dimension_numbers = #tpu.dot_dimension_numbers<[1], [0], [0], [1], [0, 0, 1, 1], [], []>} : vector<16x256xbf16>, vector<256x128xbf16>, vector<16x128xf32> -> vector<16x128xf32>
    %9 = arith.maximumf %6, %8 : vector<16x128xf32>
    %c0_7 = arith.constant 0 : index
    %c384 = arith.constant 384 : index
    %10 = vector.load %arg2[%c0_7, %c384] : memref<256x512xbf16, #tpu.memory_space<vmem>>, vector<256x128xbf16>
    %cst_8 = arith.constant dense<0.000000e+00> : vector<16x128xf32>
    %11 = tpu.matmul %1, %10, %cst_8 {dimension_numbers = #tpu.dot_dimension_numbers<[1], [0], [0], [1], [0, 0, 1, 1], [], []>} : vector<16x256xbf16>, vector<256x128xbf16>, vector<16x128xf32> -> vector<16x128xf32>
    %12 = arith.maximumf %9, %11 : vector<16x128xf32>
    %c64_i32 = arith.constant 64 : i32
    %13 = tpu.dynamic_rotate %12 by %c64_i32 dim 1 : vector<16x128xf32>, i32 -> vector<16x128xf32>
    %14 = arith.maximumf %12, %13 : vector<16x128xf32>
    %c32_i32 = arith.constant 32 : i32
    %15 = tpu.dynamic_rotate %14 by %c32_i32 dim 1 : vector<16x128xf32>, i32 -> vector<16x128xf32>
    %16 = arith.maximumf %14, %15 : vector<16x128xf32>
    %17 = vector.extract_strided_slice %16 {offsets = [0, 0], sizes = [16, 32], strides = [1, 1]} : vector<16x128xf32> to vector<16x32xf32>
    %c0_9 = arith.constant 0 : index
    %c0_10 = arith.constant 0 : index
    %18 = vector.load %arg3[%c0_9, %c0_10] : memref<1x32xf32, #tpu.memory_space<vmem>>, vector<1x32xf32>
    %19 = vector.broadcast %18 : vector<1x32xf32> to vector<16x32xf32>
    %20 = arith.addf %17, %19 : vector<16x32xf32>
    %cst_11 = arith.constant 0.000000e+00 : f32
    %21 = vector.broadcast %cst_11 : f32 to vector<16x32xf32>
    %22 = arith.maximumf %20, %21 : vector<16x32xf32>
    %c0_12 = arith.constant 0 : index
    %c0_13 = arith.constant 0 : index
    %23 = vector.load %arg4[%c0_12, %c0_13] : memref<16x32xf32, #tpu.memory_space<vmem>>, vector<16x32xf32>
    tpu.vector_store %arg4[%c0_12, %c0_13], %22 {strides = array<i32>} : memref<16x32xf32, #tpu.memory_space<vmem>>, vector<16x32xf32>,
    return
  }
  func.func @transform_0(%arg0: i32) -> (i32, i32) {
    %c0_i32 = arith.constant 0 : i32
    %c0_i32_0 = arith.constant 0 : i32
    return %arg0, %c0_i32 : i32, i32
  }
  func.func @transform_1(%arg0: i32) -> (i32, i32) {
    %c0_i32 = arith.constant 0 : i32
    %c0_i32_0 = arith.constant 0 : i32
    %c0_i32_1 = arith.constant 0 : i32
    return %c0_i32, %c0_i32_0 : i32, i32
  }
  func.func @transform_2(%arg0: i32) -> (i32, i32) {
    %c0_i32 = arith.constant 0 : i32
    %c0_i32_0 = arith.constant 0 : i32
    %c0_i32_1 = arith.constant 0 : i32
    return %c0_i32, %c0_i32_0 : i32, i32
  }
  func.func @transform_3(%arg0: i32) -> (i32, i32) {
    %c0_i32 = arith.constant 0 : i32
    %c0_i32_0 = arith.constant 0 : i32
    return %arg0, %c0_i32 : i32, i32
  }
}

</mosaic_0001>

<llo_original>
// kernel: cnn_forward.1
$region0: #{cnn_forward.1}
  #allocation0 [shape = 'u32[]', space=smem, size = 0x4, offset = 0x4, fixed_abs, tag = 'smem constant byte address 0x4 - core index']
  #allocation1 [shape = 'u32[144,128]{1,0:T(1,128)}', space=vmem, size = 0x12000, scoped, tag = 'internal scratch']
  %s0 = inlined_call_operand.vmem [shape: f32[16,256], index: 0, kind: input, shape index: {}]
  %s1 = inlined_call_operand.vmem [shape: bf16[256,512], index: 1, kind: input, shape index: {}]
  %s2 = inlined_call_operand.vmem [shape: f32[1,32], index: 2, kind: input, shape index: {}]
  %s3 = inlined_call_operand.hbm [shape: f32[16,32], index: 3, kind: output, shape index: {}]
  %s4 = sld [smem:[#allocation0]]
  $region22: #{cnn_forward.1} parent=0
    _
  %s6 = ssub.s32 1, %s4
  %s7 = scalar_select 0, %s6, %s4
  $region1: #{cnn_forward.1} parent=0
    #allocation2 [shape = 'u8[8192]{0}', space=vmem, size = 0x2000, scoped, tag = 'output window, operand 0, single buffered']
    #allocation3 [shape = 's32[1]{0}', space=sflag, size = 0x4, scoped, tag = 'scoped memory for cnn_forward.1']
    %8 = vsyncpa [#allocation3], 0
    // Predicated region
    $region2: #{cnn_forward.1} parent=1 // pred_check
      _
    $region3: #{cnn_forward.1} parent=1 // pred_check_branch
      %10 = sbr.rel (0) target = $region5
    $region4: #{cnn_forward.1} parent=1 // pred_region
      _
    $region5: #{cnn_forward.1} parent=1 // pred_fallthru
      _
    // Predicated region
    $region6: #{cnn_forward.1} parent=1 // pred_check
      _
    $region7: #{cnn_forward.1} parent=1 // pred_check_branch
      %12 = sbr.rel (0) target = $region9
    $region8: #{cnn_forward.1} parent=1 // pred_region
      _
    $region9: #{cnn_forward.1} parent=1 // pred_fallthru
      _
    // Predicated region
    $region10: #{cnn_forward.1} parent=1 // pred_check
      _
    $region11: #{cnn_forward.1} parent=1 // pred_check_branch
      %14 = sbr.rel (0) target = $region13
    $region12: #{cnn_forward.1} parent=1 // pred_region
      _
    $region13: #{cnn_forward.1} parent=1 // pred_fallthru
      _
    %v16 = vld [vmem:[%s0] sm:$0xff]
    %v17 = vld [vmem:[%s0 + $0x8] sm:$0xff]
    %v18 = vld [vmem:[%s0 + $0x10] sm:$0xff]
    %v19 = vld [vmem:[%s0 + $0x18] sm:$0xff]
    %v20 = vpack.c.bf16 %v18, %v16
    %v21 = vpack.c.bf16 %v19, %v17
    %v22 = vld [vmem:[%s1] sm:$0xf]
    %v23 = vld [vmem:[%s1 + $0x10] sm:$0xf]
    %v24 = vld [vmem:[%s1 + $0x20] sm:$0xf]
    %v25 = vld [vmem:[%s1 + $0x30] sm:$0xf]
    %v26 = vld [vmem:[%s1 + $0x40] sm:$0xf]
    %v27 = vld [vmem:[%s1 + $0x50] sm:$0xf]
    %v28 = vld [vmem:[%s1 + $0x60] sm:$0xf]
    %v29 = vld [vmem:[%s1 + $0x70] sm:$0xf]
    %v30 = vld [vmem:[%s1 + $0x80] sm:$0xf]
    %v31 = vld [vmem:[%s1 + $0x90] sm:$0xf]
    %v32 = vld [vmem:[%s1 + $0xa0] sm:$0xf]
    %v33 = vld [vmem:[%s1 + $0xb0] sm:$0xf]
    %v34 = vld [vmem:[%s1 + $0xc0] sm:$0xf]
    %v35 = vld [vmem:[%s1 + $0xd0] sm:$0xf]
    %v36 = vld [vmem:[%s1 + $0xe0] sm:$0xf]
    %v37 = vld [vmem:[%s1 + $0xf0] sm:$0xf]
    %v38 = vld [vmem:[%s1 + $0x100] sm:$0xf]
    %v39 = vld [vmem:[%s1 + $0x110] sm:$0xf]
    %v40 = vld [vmem:[%s1 + $0x120] sm:$0xf]
    %v41 = vld [vmem:[%s1 + $0x130] sm:$0xf]
    %v42 = vld [vmem:[%s1 + $0x140] sm:$0xf]
    %v43 = vld [vmem:[%s1 + $0x150] sm:$0xf]
    %v44 = vld [vmem:[%s1 + $0x160] sm:$0xf]
    %v45 = vld [vmem:[%s1 + $0x170] sm:$0xf]
    %v46 = vld [vmem:[%s1 + $0x180] sm:$0xf]
    %v47 = vld [vmem:[%s1 + $0x190] sm:$0xf]
    %v48 = vld [vmem:[%s1 + $0x1a0] sm:$0xf]
    %v49 = vld [vmem:[%s1 + $0x1b0] sm:$0xf]
    %v50 = vld [vmem:[%s1 + $0x1c0] sm:$0xf]
    %v51 = vld [vmem:[%s1 + $0x1d0] sm:$0xf]
    %v52 = vld [vmem:[%s1 + $0x1e0] sm:$0xf]
    %v53 = vld [vmem:[%s1 + $0x1f0] sm:$0xf]
    %v86 = vunpack.c.l.b16 %v22
    %v87 = vunpack.c.l.b16 %v23
    %v88 = vunpack.c.l.b16 %v24
    %v89 = vunpack.c.l.b16 %v25
    %v90 = vunpack.c.l.b16 %v26
    %v91 = vunpack.c.l.b16 %v27
    %v92 = vunpack.c.l.b16 %v28
    %v93 = vunpack.c.l.b16 %v29
    %v94 = vunpack.c.l.b16 %v30
    %v95 = vunpack.c.l.b16 %v31
    %v96 = vunpack.c.l.b16 %v32
    %v97 = vunpack.c.l.b16 %v33
    %v98 = vunpack.c.l.b16 %v34
    %v99 = vunpack.c.l.b16 %v35
    %v100 = vunpack.c.l.b16 %v36
    %v101 = vunpack.c.l.b16 %v37
    %v102 = vunpack.c.l.b16 %v38
    %v103 = vunpack.c.l.b16 %v39
    %v104 = vunpack.c.l.b16 %v40
    %v105 = vunpack.c.l.b16 %v41
    %v106 = vunpack.c.l.b16 %v42
    %v107 = vunpack.c.l.b16 %v43
    %v108 = vunpack.c.l.b16 %v44
    %v109 = vunpack.c.l.b16 %v45
    %v110 = vunpack.c.l.b16 %v46
    %v111 = vunpack.c.l.b16 %v47
    %v112 = vunpack.c.l.b16 %v48
    %v113 = vunpack.c.l.b16 %v49
    %v114 = vunpack.c.l.b16 %v50
    %v115 = vunpack.c.l.b16 %v51
    %v116 = vunpack.c.l.b16 %v52
    %v117 = vunpack.c.l.b16 %v53
    %v118 = vpack.c.b16 %v87, %v86
    %v119 = vpack.c.b16 %v89, %v88
    %v120 = vpack.c.b16 %v91, %v90
    %v121 = vpack.c.b16 %v93, %v92
    %v122 = vpack.c.b16 %v95, %v94
    %v123 = vpack.c.b16 %v97, %v96
    %v124 = vpack.c.b16 %v99, %v98
    %v125 = vpack.c.b16 %v101, %v100
    %v126 = vpack.c.b16 %v103, %v102
    %v127 = vpack.c.b16 %v105, %v104
    %v128 = vpack.c.b16 %v107, %v106
    %v129 = vpack.c.b16 %v109, %v108
    %v130 = vpack.c.b16 %v111, %v110
    %v131 = vpack.c.b16 %v113, %v112
    %v132 = vpack.c.b16 %v115, %v114
    %v133 = vpack.c.b16 %v117, %v116
    %150 = vmatprep.subr.bf16.mxu0 0
    %151 = vmatpush1.bf16.msra.mxu0 %v118
    %152 = vmatprep.subr.bf16.mxu0 0
    %153 = vmatpush1.bf16.msra.mxu0 %v119
    %154 = vmatprep.subr.bf16.mxu0 0
    %155 = vmatpush1.bf16.msra.mxu0 %v120
    %156 = vmatprep.subr.bf16.mxu0 0
    %157 = vmatpush1.bf16.msra.mxu0 %v121
    %158 = vmatprep.subr.bf16.mxu0 0
    %159 = vmatpush1.bf16.msra.mxu0 %v122
    %160 = vmatprep.subr.bf16.mxu0 0
    %161 = vmatpush1.bf16.msra.mxu0 %v123
    %162 = vmatprep.subr.bf16.mxu0 0
    %163 = vmatpush1.bf16.msra.mxu0 %v124
    %164 = vmatprep.subr.bf16.mxu0 0
    %165 = vmatpush1.bf16.msra.mxu0 %v125
    %166 = vmatprep.subr.bf16.mxu0 0
    %167 = vmatpush1.bf16.msra.mxu0 %v126
    %168 = vmatprep.subr.bf16.mxu0 0
    %169 = vmatpush1.bf16.msra.mxu0 %v127
    %170 = vmatprep.subr.bf16.mxu0 0
    %171 = vmatpush1.bf16.msra.mxu0 %v128
    %172 = vmatprep.subr.bf16.mxu0 0
    %173 = vmatpush1.bf16.msra.mxu0 %v129
    %174 = vmatprep.subr.bf16.mxu0 0
    %175 = vmatpush1.bf16.msra.mxu0 %v130
    %176 = vmatprep.subr.bf16.mxu0 0
    %177 = vmatpush1.bf16.msra.mxu0 %v131
    %178 = vmatprep.subr.bf16.mxu0 0
    %179 = vmatpush1.bf16.msra.mxu0 %v132
    %180 = vmatprep.subr.bf16.mxu0 0
    %181 = vmatpush1.bf16.msra.mxu0 %v133
    %182 = vmatprep.mubr.bf16.mxu0 %v21
    %183 = vmatmul.mubr.bf16.gmra.mrb[0].mxu0 %v20
    %v184 = vpop.f32.mrb[0].mxu0
    %v185 = vadd.f32 0.0, %v184
    %v186 = vpop.f32.mrb[0].mxu0
    %v187 = vpop.f32.mrb[0].mxu0
    %v188 = vadd.f32 0.0, %v187
    %v189 = vpop.f32.mrb[0].mxu0
    %190 = vdwg.mxu0
    %v191 = vld [vmem:[%s1 + $0x4] sm:$0xf]
    %v192 = vld [vmem:[%s1 + $0x14] sm:$0xf]
    %v193 = vld [vmem:[%s1 + $0x24] sm:$0xf]
    %v194 = vld [vmem:[%s1 + $0x34] sm:$0xf]
    %v195 = vld [vmem:[%s1 + $0x44] sm:$0xf]
    %v196 = vld [vmem:[%s1 + $0x54] sm:$0xf]
    %v197 = vld [vmem:[%s1 + $0x64] sm:$0xf]
    %v198 = vld [vmem:[%s1 + $0x74] sm:$0xf]
    %v199 = vld [vmem:[%s1 + $0x84] sm:$0xf]
    %v200 = vld [vmem:[%s1 + $0x94] sm:$0xf]
    %v201 = vld [vmem:[%s1 + $0xa4] sm:$0xf]
    %v202 = vld [vmem:[%s1 + $0xb4] sm:$0xf]
    %v203 = vld [vmem:[%s1 + $0xc4] sm:$0xf]
    %v204 = vld [vmem:[%s1 + $0xd4] sm:$0xf]
    %v205 = vld [vmem:[%s1 + $0xe4] sm:$0xf]
    %v206 = vld [vmem:[%s1 + $0xf4] sm:$0xf]
    %v207 = vld [vmem:[%s1 + $0x104] sm:$0xf]
    %v208 = vld [vmem:[%s1 + $0x114] sm:$0xf]
    %v209 = vld [vmem:[%s1 + $0x124] sm:$0xf]
    %v210 = vld [vmem:[%s1 + $0x134] sm:$0xf]
    %v211 = vld [vmem:[%s1 + $0x144] sm:$0xf]
    %v212 = vld [vmem:[%s1 + $0x154] sm:$0xf]
    %v213 = vld [vmem:[%s1 + $0x164] sm:$0xf]
    %v214 = vld [vmem:[%s1 + $0x174] sm:$0xf]
    %v215 = vld [vmem:[%s1 + $0x184] sm:$0xf]
    %v216 = vld [vmem:[%s1 + $0x194] sm:$0xf]
    %v217 = vld [vmem:[%s1 + $0x1a4] sm:$0xf]
    %v218 = vld [vmem:[%s1 + $0x1b4] sm:$0xf]
    %v219 = vld [vmem:[%s1 + $0x1c4] sm:$0xf]
    %v220 = vld [vmem:[%s1 + $0x1d4] sm:$0xf]
    %v221 = vld [vmem:[%s1 + $0x1e4] sm:$0xf]
    %v222 = vld [vmem:[%s1 + $0x1f4] sm:$0xf]
    %v255 = vunpack.c.l.b16 %v191
    %v256 = vunpack.c.l.b16 %v192
    %v257 = vunpack.c.l.b16 %v193
    %v258 = vunpack.c.l.b16 %v194
    %v259 = vunpack.c.l.b16 %v195
    %v260 = vunpack.c.l.b16 %v196
    %v261 = vunpack.c.l.b16 %v197
    %v262 = vunpack.c.l.b16 %v198
    %v263 = vunpack.c.l.b16 %v199
    %v264 = vunpack.c.l.b16 %v200
    %v265 = vunpack.c.l.b16 %v201
    %v266 = vunpack.c.l.b16 %v202
    %v267 = vunpack.c.l.b16 %v203
    %v268 = vunpack.c.l.b16 %v204
    %v269 = vunpack.c.l.b16 %v205
    %v270 = vunpack.c.l.b16 %v206
    %v271 = vunpack.c.l.b16 %v207
    %v272 = vunpack.c.l.b16 %v208
    %v273 = vunpack.c.l.b16 %v209
    %v274 = vunpack.c.l.b16 %v210
    %v275 = vunpack.c.l.b16 %v211
    %v276 = vunpack.c.l.b16 %v212
    %v277 = vunpack.c.l.b16 %v213
    %v278 = vunpack.c.l.b16 %v214
    %v279 = vunpack.c.l.b16 %v215
    %v280 = vunpack.c.l.b16 %v216
    %v281 = vunpack.c.l.b16 %v217
    %v282 = vunpack.c.l.b16 %v218
    %v283 = vunpack.c.l.b16 %v219
    %v284 = vunpack.c.l.b16 %v220
    %v285 = vunpack.c.l.b16 %v221
    %v286 = vunpack.c.l.b16 %v222
    %v287 = vpack.c.b16 %v256, %v255
    %v288 = vpack.c.b16 %v258, %v257
    %v289 = vpack.c.b16 %v260, %v259
    %v290 = vpack.c.b16 %v262, %v261
    %v291 = vpack.c.b16 %v264, %v263
    %v292 = vpack.c.b16 %v266, %v265
    %v293 = vpack.c.b16 %v268, %v267
    %v294 = vpack.c.b16 %v270, %v269
    %v295 = vpack.c.b16 %v272, %v271
    %v296 = vpack.c.b16 %v274, %v273
    %v297 = vpack.c.b16 %v276, %v275
    %v298 = vpack.c.b16 %v278, %v277
    %v299 = vpack.c.b16 %v280, %v279
    %v300 = vpack.c.b16 %v282, %v281
    %v301 = vpack.c.b16 %v284, %v283
    %v302 = vpack.c.b16 %v286, %v285
    %319 = vmatprep.subr.bf16.mxu0 0
    %320 = vmatpush1.bf16.msra.mxu0 %v287
    %321 = vmatprep.subr.bf16.mxu0 0
    %322 = vmatpush1.bf16.msra.mxu0 %v288
    %323 = vmatprep.subr.bf16.mxu0 0
    %324 = vmatpush1.bf16.msra.mxu0 %v289
    %325 = vmatprep.subr.bf16.mxu0 0
    %326 = vmatpush1.bf16.msra.mxu0 %v290
    %327 = vmatprep.subr.bf16.mxu0 0
    %328 = vmatpush1.bf16.msra.mxu0 %v291
    %329 = vmatprep.subr.bf16.mxu0 0
    %330 = vmatpush1.bf16.msra.mxu0 %v292
    %331 = vmatprep.subr.bf16.mxu0 0
    %332 = vmatpush1.bf16.msra.mxu0 %v293
    %333 = vmatprep.subr.bf16.mxu0 0
    %334 = vmatpush1.bf16.msra.mxu0 %v294
    %335 = vmatprep.subr.bf16.mxu0 0
    %336 = vmatpush1.bf16.msra.mxu0 %v295
    %337 = vmatprep.subr.bf16.mxu0 0
    %338 = vmatpush1.bf16.msra.mxu0 %v296
    %339 = vmatprep.subr.bf16.mxu0 0
    %340 = vmatpush1.bf16.msra.mxu0 %v297
    %341 = vmatprep.subr.bf16.mxu0 0
    %342 = vmatpush1.bf16.msra.mxu0 %v298
    %343 = vmatprep.subr.bf16.mxu0 0
    %344 = vmatpush1.bf16.msra.mxu0 %v299
    %345 = vmatprep.subr.bf16.mxu0 0
    %346 = vmatpush1.bf16.msra.mxu0 %v300
    %347 = vmatprep.subr.bf16.mxu0 0
    %348 = vmatpush1.bf16.msra.mxu0 %v301
    %349 = vmatprep.subr.bf16.mxu0 0
    %350 = vmatpush1.bf16.msra.mxu0 %v302
    %351 = vmatprep.mubr.bf16.mxu0 %v21
    %352 = vmatmul.mubr.bf16.gmra.mrb[0].mxu0 %v20
    %v353 = vpop.f32.mrb[0].mxu0
    %v354 = vadd.f32 0.0, %v353
    %v355 = vpop.f32.mrb[0].mxu0
    %v356 = vpop.f32.mrb[0].mxu0
    %v357 = vadd.f32 0.0, %v356
    %v358 = vpop.f32.mrb[0].mxu0
    %359 = vdwg.mxu0
    %v360 = vmax.f32 %v185, %v354
    %v361 = vmax.f32 %v188, %v357
    %v362 = vld [vmem:[%s1 + $0x8] sm:$0xf]
    %v363 = vld [vmem:[%s1 + $0x18] sm:$0xf]
    %v364 = vld [vmem:[%s1 + $0x28] sm:$0xf]
    %v365 = vld [vmem:[%s1 + $0x38] sm:$0xf]
    %v366 = vld [vmem:[%s1 + $0x48] sm:$0xf]
    %v367 = vld [vmem:[%s1 + $0x58] sm:$0xf]
    %v368 = vld [vmem:[%s1 + $0x68] sm:$0xf]
    %v369 = vld [vmem:[%s1 + $0x78] sm:$0xf]
    %v370 = vld [vmem:[%s1 + $0x88] sm:$0xf]
    %v371 = vld [vmem:[%s1 + $0x98] sm:$0xf]
    %v372 = vld [vmem:[%s1 + $0xa8] sm:$0xf]
    %v373 = vld [vmem:[%s1 + $0xb8] sm:$0xf]
    %v374 = vld [vmem:[%s1 + $0xc8] sm:$0xf]
    %v375 = vld [vmem:[%s1 + $0xd8] sm:$0xf]
    %v376 = vld [vmem:[%s1 + $0xe8] sm:$0xf]
    %v377 = vld [vmem:[%s1 + $0xf8] sm:$0xf]
    %v378 = vld [vmem:[%s1 + $0x108] sm:$0xf]
    %v379 = vld [vmem:[%s1 + $0x118] sm:$0xf]
    %v380 = vld [vmem:[%s1 + $0x128] sm:$0xf]
    %v381 = vld [vmem:[%s1 + $0x138] sm:$0xf]
    %v382 = vld [vmem:[%s1 + $0x148] sm:$0xf]
    %v383 = vld [vmem:[%s1 + $0x158] sm:$0xf]
    %v384 = vld [vmem:[%s1 + $0x168] sm:$0xf]
    %v385 = vld [vmem:[%s1 + $0x178] sm:$0xf]
    %v386 = vld [vmem:[%s1 + $0x188] sm:$0xf]
    %v387 = vld [vmem:[%s1 + $0x198] sm:$0xf]
    %v388 = vld [vmem:[%s1 + $0x1a8] sm:$0xf]
    %v389 = vld [vmem:[%s1 + $0x1b8] sm:$0xf]
    %v390 = vld [vmem:[%s1 + $0x1c8] sm:$0xf]
    %v391 = vld [vmem:[%s1 + $0x1d8] sm:$0xf]
    %v392 = vld [vmem:[%s1 + $0x1e8] sm:$0xf]
    %v393 = vld [vmem:[%s1 + $0x1f8] sm:$0xf]
    %v426 = vunpack.c.l.b16 %v362
    %v427 = vunpack.c.l.b16 %v363
    %v428 = vunpack.c.l.b16 %v364
    %v429 = vunpack.c.l.b16 %v365
    %v430 = vunpack.c.l.b16 %v366
    %v431 = vunpack.c.l.b16 %v367
    %v432 = vunpack.c.l.b16 %v368
    %v433 = vunpack.c.l.b16 %v369
    %v434 = vunpack.c.l.b16 %v370
    %v435 = vunpack.c.l.b16 %v371
    %v436 = vunpack.c.l.b16 %v372
    %v437 = vunpack.c.l.b16 %v373
    %v438 = vunpack.c.l.b16 %v374
    %v439 = vunpack.c.l.b16 %v375
    %v440 = vunpack.c.l.b16 %v376
    %v441 = vunpack.c.l.b16 %v377
    %v442 = vunpack.c.l.b16 %v378
    %v443 = vunpack.c.l.b16 %v379
    %v444 = vunpack.c.l.b16 %v380
    %v445 = vunpack.c.l.b16 %v381
    %v446 = vunpack.c.l.b16 %v382
    %v447 = vunpack.c.l.b16 %v383
    %v448 = vunpack.c.l.b16 %v384
    %v449 = vunpack.c.l.b16 %v385
    %v450 = vunpack.c.l.b16 %v386
    %v451 = vunpack.c.l.b16 %v387
    %v452 = vunpack.c.l.b16 %v388
    %v453 = vunpack.c.l.b16 %v389
    %v454 = vunpack.c.l.b16 %v390
    %v455 = vunpack.c.l.b16 %v391
    %v456 = vunpack.c.l.b16 %v392
    %v457 = vunpack.c.l.b16 %v393
    %v458 = vpack.c.b16 %v427, %v426
    %v459 = vpack.c.b16 %v429, %v428
    %v460 = vpack.c.b16 %v431, %v430
    %v461 = vpack.c.b16 %v433, %v432
    %v462 = vpack.c.b16 %v435, %v434
    %v463 = vpack.c.b16 %v437, %v436
    %v464 = vpack.c.b16 %v439, %v438
    %v465 = vpack.c.b16 %v441, %v440
    %v466 = vpack.c.b16 %v443, %v442
    %v467 = vpack.c.b16 %v445, %v444
    %v468 = vpack.c.b16 %v447, %v446
    %v469 = vpack.c.b16 %v449, %v448
    %v470 = vpack.c.b16 %v451, %v450
    %v471 = vpack.c.b16 %v453, %v452
    %v472 = vpack.c.b16 %v455, %v454
    %v473 = vpack.c.b16 %v457, %v456
    %490 = vmatprep.subr.bf16.mxu0 0
    %491 = vmatpush1.bf16.msra.mxu0 %v458
    %492 = vmatprep.subr.bf16.mxu0 0
    %493 = vmatpush1.bf16.msra.mxu0 %v459
    %494 = vmatprep.subr.bf16.mxu0 0
    %495 = vmatpush1.bf16.msra.mxu0 %v460
    %496 = vmatprep.subr.bf16.mxu0 0
    %497 = vmatpush1.bf16.msra.mxu0 %v461
    %498 = vmatprep.subr.bf16.mxu0 0
    %499 = vmatpush1.bf16.msra.mxu0 %v462
    %500 = vmatprep.subr.bf16.mxu0 0
    %501 = vmatpush1.bf16.msra.mxu0 %v463
    %502 = vmatprep.subr.bf16.mxu0 0
    %503 = vmatpush1.bf16.msra.mxu0 %v464
    %504 = vmatprep.subr.bf16.mxu0 0
    %505 = vmatpush1.bf16.msra.mxu0 %v465
    %506 = vmatprep.subr.bf16.mxu0 0
    %507 = vmatpush1.bf16.msra.mxu0 %v466
    %508 = vmatprep.subr.bf16.mxu0 0
    %509 = vmatpush1.bf16.msra.mxu0 %v467
    %510 = vmatprep.subr.bf16.mxu0 0
    %511 = vmatpush1.bf16.msra.mxu0 %v468
    %512 = vmatprep.subr.bf16.mxu0 0
    %513 = vmatpush1.bf16.msra.mxu0 %v469
    %514 = vmatprep.subr.bf16.mxu0 0
    %515 = vmatpush1.bf16.msra.mxu0 %v470
    %516 = vmatprep.subr.bf16.mxu0 0
    %517 = vmatpush1.bf16.msra.mxu0 %v471
    %518 = vmatprep.subr.bf16.mxu0 0
    %519 = vmatpush1.bf16.msra.mxu0 %v472
    %520 = vmatprep.subr.bf16.mxu0 0
    %521 = vmatpush1.bf16.msra.mxu0 %v473
    %522 = vmatprep.mubr.bf16.mxu0 %v21
    %523 = vmatmul.mubr.bf16.gmra.mrb[0].mxu0 %v20
    %v524 = vpop.f32.mrb[0].mxu0
    %v525 = vadd.f32 0.0, %v524
    %v526 = vpop.f32.mrb[0].mxu0
    %v527 = vpop.f32.mrb[0].mxu0
    %v528 = vadd.f32 0.0, %v527
    %v529 = vpop.f32.mrb[0].mxu0
    %530 = vdwg.mxu0
    %v531 = vmax.f32 %v360, %v525
    %v532 = vmax.f32 %v361, %v528
    %v533 = vld [vmem:[%s1 + $0xc] sm:$0xf]
    %v534 = vld [vmem:[%s1 + $0x1c] sm:$0xf]
    %v535 = vld [vmem:[%s1 + $0x2c] sm:$0xf]
    %v536 = vld [vmem:[%s1 + $0x3c] sm:$0xf]
    %v537 = vld [vmem:[%s1 + $0x4c] sm:$0xf]
    %v538 = vld [vmem:[%s1 + $0x5c] sm:$0xf]
    %v539 = vld [vmem:[%s1 + $0x6c] sm:$0xf]
    %v540 = vld [vmem:[%s1 + $0x7c] sm:$0xf]
    %v541 = vld [vmem:[%s1 + $0x8c] sm:$0xf]
    %v542 = vld [vmem:[%s1 + $0x9c] sm:$0xf]
    %v543 = vld [vmem:[%s1 + $0xac] sm:$0xf]
    %v544 = vld [vmem:[%s1 + $0xbc] sm:$0xf]
    %v545 = vld [vmem:[%s1 + $0xcc] sm:$0xf]
    %v546 = vld [vmem:[%s1 + $0xdc] sm:$0xf]
    %v547 = vld [vmem:[%s1 + $0xec] sm:$0xf]
    %v548 = vld [vmem:[%s1 + $0xfc] sm:$0xf]
    %v549 = vld [vmem:[%s1 + $0x10c] sm:$0xf]
    %v550 = vld [vmem:[%s1 + $0x11c] sm:$0xf]
    %v551 = vld [vmem:[%s1 + $0x12c] sm:$0xf]
    %v552 = vld [vmem:[%s1 + $0x13c] sm:$0xf]
    %v553 = vld [vmem:[%s1 + $0x14c] sm:$0xf]
    %v554 = vld [vmem:[%s1 + $0x15c] sm:$0xf]
    %v555 = vld [vmem:[%s1 + $0x16c] sm:$0xf]
    %v556 = vld [vmem:[%s1 + $0x17c] sm:$0xf]
    %v557 = vld [vmem:[%s1 + $0x18c] sm:$0xf]
    %v558 = vld [vmem:[%s1 + $0x19c] sm:$0xf]
    %v559 = vld [vmem:[%s1 + $0x1ac] sm:$0xf]
    %v560 = vld [vmem:[%s1 + $0x1bc] sm:$0xf]
    %v561 = vld [vmem:[%s1 + $0x1cc] sm:$0xf]
    %v562 = vld [vmem:[%s1 + $0x1dc] sm:$0xf]
    %v563 = vld [vmem:[%s1 + $0x1ec] sm:$0xf]
    %v564 = vld [vmem:[%s1 + $0x1fc] sm:$0xf]
    %v597 = vunpack.c.l.b16 %v533
    %v598 = vunpack.c.l.b16 %v534
    %v599 = vunpack.c.l.b16 %v535
    %v600 = vunpack.c.l.b16 %v536
    %v601 = vunpack.c.l.b16 %v537
    %v602 = vunpack.c.l.b16 %v538
    %v603 = vunpack.c.l.b16 %v539
    %v604 = vunpack.c.l.b16 %v540
    %v605 = vunpack.c.l.b16 %v541
    %v606 = vunpack.c.l.b16 %v542
    %v607 = vunpack.c.l.b16 %v543
    %v608 = vunpack.c.l.b16 %v544
    %v609 = vunpack.c.l.b16 %v545
    %v610 = vunpack.c.l.b16 %v546
    %v611 = vunpack.c.l.b16 %v547
    %v612 = vunpack.c.l.b16 %v548
    %v613 = vunpack.c.l.b16 %v549
    %v614 = vunpack.c.l.b16 %v550
    %v615 = vunpack.c.l.b16 %v551
    %v616 = vunpack.c.l.b16 %v552
    %v617 = vunpack.c.l.b16 %v553
    %v618 = vunpack.c.l.b16 %v554
    %v619 = vunpack.c.l.b16 %v555
    %v620 = vunpack.c.l.b16 %v556
    %v621 = vunpack.c.l.b16 %v557
    %v622 = vunpack.c.l.b16 %v558
    %v623 = vunpack.c.l.b16 %v559
    %v624 = vunpack.c.l.b16 %v560
    %v625 = vunpack.c.l.b16 %v561
    %v626 = vunpack.c.l.b16 %v562
    %v627 = vunpack.c.l.b16 %v563
    %v628 = vunpack.c.l.b16 %v564
    %v629 = vpack.c.b16 %v598, %v597
    %v630 = vpack.c.b16 %v600, %v599
    %v631 = vpack.c.b16 %v602, %v601
    %v632 = vpack.c.b16 %v604, %v603
    %v633 = vpack.c.b16 %v606, %v605
    %v634 = vpack.c.b16 %v608, %v607
    %v635 = vpack.c.b16 %v610, %v609
    %v636 = vpack.c.b16 %v612, %v611
    %v637 = vpack.c.b16 %v614, %v613
    %v638 = vpack.c.b16 %v616, %v615
    %v639 = vpack.c.b16 %v618, %v617
    %v640 = vpack.c.b16 %v620, %v619
    %v641 = vpack.c.b16 %v622, %v621
    %v642 = vpack.c.b16 %v624, %v623
    %v643 = vpack.c.b16 %v626, %v625
    %v644 = vpack.c.b16 %v628, %v627
    %661 = vmatprep.subr.bf16.mxu0 0
    %662 = vmatpush1.bf16.msra.mxu0 %v629
    %663 = vmatprep.subr.bf16.mxu0 0
    %664 = vmatpush1.bf16.msra.mxu0 %v630
    %665 = vmatprep.subr.bf16.mxu0 0
    %666 = vmatpush1.bf16.msra.mxu0 %v631
    %667 = vmatprep.subr.bf16.mxu0 0
    %668 = vmatpush1.bf16.msra.mxu0 %v632
    %669 = vmatprep.subr.bf16.mxu0 0
    %670 = vmatpush1.bf16.msra.mxu0 %v633
    %671 = vmatprep.subr.bf16.mxu0 0
    %672 = vmatpush1.bf16.msra.mxu0 %v634
    %673 = vmatprep.subr.bf16.mxu0 0
    %674 = vmatpush1.bf16.msra.mxu0 %v635
    %675 = vmatprep.subr.bf16.mxu0 0
    %676 = vmatpush1.bf16.msra.mxu0 %v636
    %677 = vmatprep.subr.bf16.mxu0 0
    %678 = vmatpush1.bf16.msra.mxu0 %v637
    %679 = vmatprep.subr.bf16.mxu0 0
    %680 = vmatpush1.bf16.msra.mxu0 %v638
    %681 = vmatprep.subr.bf16.mxu0 0
    %682 = vmatpush1.bf16.msra.mxu0 %v639
    %683 = vmatprep.subr.bf16.mxu0 0
    %684 = vmatpush1.bf16.msra.mxu0 %v640
    %685 = vmatprep.subr.bf16.mxu0 0
    %686 = vmatpush1.bf16.msra.mxu0 %v641
    %687 = vmatprep.subr.bf16.mxu0 0
    %688 = vmatpush1.bf16.msra.mxu0 %v642
    %689 = vmatprep.subr.bf16.mxu0 0
    %690 = vmatpush1.bf16.msra.mxu0 %v643
    %691 = vmatprep.subr.bf16.mxu0 0
    %692 = vmatpush1.bf16.msra.mxu0 %v644
    %693 = vmatprep.mubr.bf16.mxu0 %v21
    %694 = vmatmul.mubr.bf16.gmra.mrb[0].mxu0 %v20
    %v695 = vpop.f32.mrb[0].mxu0
    %v696 = vadd.f32 0.0, %v695
    %v697 = vpop.f32.mrb[0].mxu0
    %v698 = vpop.f32.mrb[0].mxu0
    %v699 = vadd.f32 0.0, %v698
    %v700 = vpop.f32.mrb[0].mxu0
    %701 = vdwg.mxu0
    %v702 = vmax.f32 %v531, %v696
    %v703 = vmax.f32 %v532, %v699
    %704 = vrot.lane.b32.xlu0 %v702, 64
    %v705 = vpop.permute.xlu0 %704
    %706 = vrot.lane.b32.xlu0 %v703, 64
    %v707 = vpop.permute.xlu0 %706
    %v708 = vmax.f32 %v702, %v705
    %v709 = vmax.f32 %v703, %v707
    %710 = vrot.lane.b32.xlu0 %v708, 32
    %v711 = vpop.permute.xlu0 %710
    %712 = vrot.lane.b32.xlu0 %v709, 32
    %v713 = vpop.permute.xlu0 %712
    %v714 = vmax.f32 %v708, %v711
    %v715 = vmax.f32 %v709, %v713
    %v716 = vld [vmem:[%s2] sm:$0x1]
    %v718 = vlaneseq
    %v719 = vshrl.u32 %v718, 7
    %v720 = vsub.s32 0, %v719
    %v721 = vrot.slane %v716, %v720
    %v723 = vadd.f32 %v714, %v721
    %v724 = vadd.f32 %v715, %v721
    %v725 = vmax.f32 %v723, 0.0
    %v726 = vmax.f32 %v724, 0.0
    %vm727 = vcmask 261120
    %728 = vst.msk [vmem:[#allocation2] sm:$0xff] %vm727, %v725
    %729 = vst.msk [vmem:[#allocation2 + $0x8] sm:$0xff] %vm727, %v726
    // Predicated region
    $region14: #{cnn_forward.1} parent=1 // pred_check
      _
    $region15: #{cnn_forward.1} parent=1 // pred_check_branch
      %731 = sbr.rel (0) target = $region17
    $region16: #{cnn_forward.1} parent=1 // pred_region
      %s733 = ssub.s32 256, 256
      %734 = vsyncadd [#allocation3], %s733
      %s735 = sshll.u32 [#allocation2], 4
      %s736 = int_to_ptr.vmem [resolvable:$true] %s735
      %741 = dma.vmem_to_hbm [thread:$0]  %s736, 256, %s3, [#allocation3], 128, 128, 8
    $region17: #{cnn_forward.1} parent=1 // pred_fallthru
      _
    // Predicated region
    $region18: #{cnn_forward.1} parent=1 // pred_check
      _
    $region19: #{cnn_forward.1} parent=1 // pred_check_branch
      %743 = sbr.rel (0) target = $region21
    $region20: #{cnn_forward.1} parent=1 // pred_region
      %744 = dma.done [#allocation3], 256
    $region21: #{cnn_forward.1} parent=1 // pred_fallthru
      _
    %745 = vsyncpa [#allocation3], 1

</llo_original>
